<compile_context>
chip_gen: v5e
topology: v5e:2x2
jax: 0.10.0
libtpu: 0.0.40
codegen_flags: <defaults>
</compile_context>

<pallas_src>
import math
import jax
import jax.numpy as jnp
from jax import lax
from jax.experimental import pallas as pl
from jax.experimental.pallas import tpu as pltpu


def bidirectional_lstm(x, params):
    """x: (T, B, I) f32 -> (T, B, nOut) f32."""
    wih_f, whh_f, b_f, wih_b, whh_b, b_b, w_lin, b_lin = params
    T, B, I = x.shape
    H = whh_f.shape[0]
    nOut = w_lin.shape[1]
    G = 4 * H

    # One-time parameter fusion (ideally hoisted to param-load time):
    #   rows 0:I   -> input weights, rows I:I+H -> hidden weights
    #   cols 0:4H  -> forward direction, cols 4H:8H -> backward direction
    w_fused = jnp.concatenate(
        [jnp.concatenate([wih_f, whh_f], axis=0),
         jnp.concatenate([wih_b, whh_b], axis=0)], axis=1)        # (I+H, 8H)
    b_fused = jnp.concatenate([b_f, b_b], axis=1)                 # (1, 8H)

    x2d = x.reshape(T * B, I)                                     # row = t*B + b

    def kernel(x_ref, w_ref, b_ref, wlin_ref, blin_ref, out_ref):
        W = w_ref[...]                      # (I+H, 8H), VMEM resident
        bias = b_ref[...]                   # (1, 8H)
        # Stacked state for both directions: rows 0:B = fwd, rows B:2B = bwd.
        h = jnp.zeros((2 * B, H), jnp.float32)
        c = jnp.zeros((2 * B, H), jnp.float32)
        hs_f, hs_b = [], []
        # Fully unrolled static time loop: all indices are compile-time
        # constants, so every load/store is static and the whole recurrence
        # stays in vregs.
        for t in range(T):
            x_f = x_ref[t * B:(t + 1) * B, :]                     # x[t]
            x_b = x_ref[(T - 1 - t) * B:(T - t) * B, :]           # x[T-1-t]
            lhs = jnp.concatenate(
                [jnp.concatenate([x_f, x_b], axis=0), h], axis=1)  # (2B, I+H)
            # One MXU op for both directions and both (x,h) matmuls.
            g = jnp.dot(lhs, W, preferred_element_type=jnp.float32) + bias  # (2B, 8H)
            # Valid gate blocks: fwd rows with fwd cols, bwd rows with bwd cols.
            gates = jnp.concatenate([g[:B, :G], g[B:, G:]], axis=0)          # (2B, 4H)
            i_g = jax.nn.sigmoid(gates[:, 0 * H:1 * H])
            f_g = jax.nn.sigmoid(gates[:, 1 * H:2 * H])
            g_g = jnp.tanh(gates[:, 2 * H:3 * H])
            o_g = jax.nn.sigmoid(gates[:, 3 * H:4 * H])
            c = f_g * c + i_g * g_g
            h = o_g * jnp.tanh(c)
            hs_f.append(h[:B])              # forward hidden at time t
            hs_b.append(h[B:])              # backward hidden at time T-1-t
        # recurrent[t, b] = [h_fwd[t, b] | h_bwd[t, b]]  ->  (T*B, 2H)
        rec = jnp.concatenate(
            [jnp.concatenate([hs_f[t], hs_b[T - 1 - t]], axis=1)
             for t in range(T)], axis=0)
        # Fused output projection: (T*B, 2H) @ (2H, nOut) + bias.
        out_ref[...] = (jnp.dot(rec, wlin_ref[...],
                                preferred_element_type=jnp.float32)
                        + blin_ref[...])

    out = pl.pallas_call(
        kernel,
        out_shape=jax.ShapeDtypeStruct((T * B, nOut), jnp.float32),
        in_specs=[
            pl.BlockSpec((T * B, I), lambda: (0, 0)),             # x (whole seq)
            pl.BlockSpec((I + H, 8 * H), lambda: (0, 0)),         # fused LSTM weights
            pl.BlockSpec((1, 8 * H), lambda: (0, 0)),             # fused LSTM bias
            pl.BlockSpec((2 * H, nOut), lambda: (0, 0)),          # linear weight
            pl.BlockSpec((1, nOut), lambda: (0, 0)),              # linear bias
        ],
        out_specs=pl.BlockSpec((T * B, nOut), lambda: (0, 0)),
    )(x2d, w_fused, b_fused, w_lin, b_lin)
    return out.reshape(T, B, nOut)


def _ref_forward(x, params):
    """Pure-JAX reference matching PyTorch nn.LSTM(bidirectional) + nn.Linear."""
    wih_f, whh_f, b_f, wih_b, whh_b, b_b, w_lin, b_lin = params
    T, B, _ = x.shape
    H = whh_f.shape[0]

    def run_dir(xs, wih, whh, b):
        def step(carry, xt):
            h, c = carry
            g = xt @ wih + h @ whh + b
            i = jax.nn.sigmoid(g[:, :H])
            f = jax.nn.sigmoid(g[:, H:2 * H])
            gg = jnp.tanh(g[:, 2 * H:3 * H])
            o = jax.nn.sigmoid(g[:, 3 * H:])
            c = f * c + i * gg
            h = o * jnp.tanh(c)
            return (h, c), h
        init = (jnp.zeros((B, H), jnp.float32), jnp.zeros((B, H), jnp.float32))
        _, hs = lax.scan(step, init, xs)
        return hs

    rec_f = run_dir(x, wih_f, whh_f, b_f)
    rec_b = run_dir(x[::-1], wih_b, whh_b, b_b)[::-1]
    rec = jnp.concatenate([rec_f, rec_b], axis=-1).reshape(T * B, 2 * H)
    return (rec @ w_lin + b_lin).reshape(T, B, -1)


if __name__ == "__main__":
    T, B, I, H, nOut = 8, 2, 16, 32, 8

    key = jax.random.PRNGKey(0)
    ks = jax.random.split(key, 11)
    k = 1.0 / math.sqrt(H)

    def u(kk, shape, bound):
        return jax.random.uniform(kk, shape, jnp.float32, -bound, bound)

    # PyTorch layout: weight_ih (4H, I), weight_hh (4H, H), gate order [i,f,g,o].
    # Pre-transpose for the kernel; combine bias_ih + bias_hh.
    wih_f = u(ks[0], (4 * H, I), k).T
    whh_f = u(ks[1], (4 * H, H), k).T
    b_f = (u(ks[2], (4 * H,), k) + u(ks[3], (4 * H,), k)).reshape(1, 4 * H)
    wih_b = u(ks[4], (4 * H, I), k).T
    whh_b = u(ks[5], (4 * H, H), k).T
    b_b = (u(ks[6], (4 * H,), k) + u(ks[7], (4 * H,), k)).reshape(1, 4 * H)

    kl = 1.0 / math.sqrt(2 * H)
    w_lin = u(ks[8], (nOut, 2 * H), kl).T            # (2H, nOut)
    b_lin = u(ks[9], (1, nOut), kl)

    x = jax.random.normal(ks[10], (T, B, I), jnp.float32)
    params = (wih_f, whh_f, b_f, wih_b, whh_b, b_b, w_lin, b_lin)

    out = bidirectional_lstm(x, params)
    out = jax.block_until_ready(out)

    ref = _ref_forward(x, params)
    assert out.shape == (T, B, nOut)
    assert bool(jnp.allclose(out, ref, atol=2e-2, rtol=2e-2)), \
        float(jnp.max(jnp.abs(out - ref)))

    print("KERNEL_OK")
</pallas_src>

<mosaic_0001>
module attributes {stable_mosaic.version = 11 : i64} {
  func.func @kernel(%arg0: memref<16x16xf32, #tpu.memory_space<vmem>>, %arg1: memref<48x256xf32, #tpu.memory_space<vmem>>, %arg2: memref<1x256xf32, #tpu.memory_space<vmem>>, %arg3: memref<64x8xf32, #tpu.memory_space<vmem>>, %arg4: memref<1x8xf32, #tpu.memory_space<vmem>>, %arg5: memref<16x8xf32, #tpu.memory_space<vmem>>) attributes {dimension_semantics = [], scalar_prefetch = 0 : i64, scratch_operands = 0 : i64, tpu.core_type = #tpu.core_type<tc>} {
    %c0 = arith.constant 0 : index
    %c0_0 = arith.constant 0 : index
    %0 = vector.load %arg1[%c0, %c0_0] : memref<48x256xf32, #tpu.memory_space<vmem>>, vector<48x256xf32>
    %c0_1 = arith.constant 0 : index
    %c0_2 = arith.constant 0 : index
    %1 = vector.load %arg2[%c0_1, %c0_2] : memref<1x256xf32, #tpu.memory_space<vmem>>, vector<1x256xf32>
    %cst = arith.constant 0.000000e+00 : f32
    %2 = vector.broadcast %cst : f32 to vector<4x32xf32>
    %cst_3 = arith.constant 0.000000e+00 : f32
    %3 = vector.broadcast %cst_3 : f32 to vector<4x32xf32>
    %c0_4 = arith.constant 0 : index
    %c0_5 = arith.constant 0 : index
    %4 = vector.load %arg0[%c0_4, %c0_5] : memref<16x16xf32, #tpu.memory_space<vmem>>, vector<2x16xf32>
    %c14 = arith.constant 14 : index
    %c0_6 = arith.constant 0 : index
    %5 = vector.load %arg0[%c14, %c0_6] : memref<16x16xf32, #tpu.memory_space<vmem>>, vector<2x16xf32>
    %6 = tpu.concatenate %4, %5 in 0 : vector<2x16xf32>, vector<2x16xf32> -> vector<4x16xf32>
    %7 = tpu.concatenate %6, %2 in 1 : vector<4x16xf32>, vector<4x32xf32> -> vector<4x48xf32>
    %cst_7 = arith.constant dense<0.000000e+00> : vector<4x256xf32>
    %8 = tpu.matmul %7, %0, %cst_7 {dimension_numbers = #tpu.dot_dimension_numbers<[1], [0], [0], [1], [0, 0, 1, 1], [], []>} : vector<4x48xf32>, vector<48x256xf32>, vector<4x256xf32> -> vector<4x256xf32>
    %9 = vector.broadcast %1 : vector<1x256xf32> to vector<4x256xf32>
    %10 = arith.addf %8, %9 : vector<4x256xf32>
    %11 = vector.extract_strided_slice %10 {offsets = [0, 0], sizes = [2, 128], strides = [1, 1]} : vector<4x256xf32> to vector<2x128xf32>
    %12 = vector.extract_strided_slice %10 {offsets = [2, 128], sizes = [2, 128], strides = [1, 1]} : vector<4x256xf32> to vector<2x128xf32>
    %13 = tpu.concatenate %11, %12 in 0 : vector<2x128xf32>, vector<2x128xf32> -> vector<4x128xf32>
    %14 = vector.extract_strided_slice %13 {offsets = [0, 0], sizes = [4, 32], strides = [1, 1]} : vector<4x128xf32> to vector<4x32xf32>
    %15 = arith.negf %14 : vector<4x32xf32>
    %16 = math.exp %15 : vector<4x32xf32>
    %cst_8 = arith.constant 1.000000e+00 : f32
    %17 = vector.broadcast %cst_8 : f32 to vector<4x32xf32>
    %18 = arith.addf %17, %16 : vector<4x32xf32>
    %19 = arith.divf %17, %18 : vector<4x32xf32>
    %20 = vector.extract_strided_slice %13 {offsets = [0, 32], sizes = [4, 32], strides = [1, 1]} : vector<4x128xf32> to vector<4x32xf32>
    %21 = arith.negf %20 : vector<4x32xf32>
    %22 = math.exp %21 : vector<4x32xf32>
    %cst_9 = arith.constant 1.000000e+00 : f32
    %23 = vector.broadcast %cst_9 : f32 to vector<4x32xf32>
    %24 = arith.addf %23, %22 : vector<4x32xf32>
    %25 = arith.divf %23, %24 : vector<4x32xf32>
    %26 = vector.extract_strided_slice %13 {offsets = [0, 64], sizes = [4, 32], strides = [1, 1]} : vector<4x128xf32> to vector<4x32xf32>
    %27 = math.tanh %26 : vector<4x32xf32>
    %28 = vector.extract_strided_slice %13 {offsets = [0, 96], sizes = [4, 32], strides = [1, 1]} : vector<4x128xf32> to vector<4x32xf32>
    %29 = arith.negf %28 : vector<4x32xf32>
    %30 = math.exp %29 : vector<4x32xf32>
    %cst_10 = arith.constant 1.000000e+00 : f32
    %31 = vector.broadcast %cst_10 : f32 to vector<4x32xf32>
    %32 = arith.addf %31, %30 : vector<4x32xf32>
    %33 = arith.divf %31, %32 : vector<4x32xf32>
    %34 = arith.mulf %25, %3 : vector<4x32xf32>
    %35 = arith.mulf %19, %27 : vector<4x32xf32>
    %36 = arith.addf %34, %35 : vector<4x32xf32>
    %37 = math.tanh %36 : vector<4x32xf32>
    %38 = arith.mulf %33, %37 : vector<4x32xf32>
    %39 = vector.extract_strided_slice %38 {offsets = [0, 0], sizes = [2, 32], strides = [1, 1]} : vector<4x32xf32> to vector<2x32xf32>
    %40 = vector.extract_strided_slice %38 {offsets = [2, 0], sizes = [2, 32], strides = [1, 1]} : vector<4x32xf32> to vector<2x32xf32>
    %c2 = arith.constant 2 : index
    %c0_11 = arith.constant 0 : index
    %41 = vector.load %arg0[%c2, %c0_11] : memref<16x16xf32, #tpu.memory_space<vmem>>, vector<2x16xf32>
    %c12 = arith.constant 12 : index
    %c0_12 = arith.constant 0 : index
    %42 = vector.load %arg0[%c12, %c0_12] : memref<16x16xf32, #tpu.memory_space<vmem>>, vector<2x16xf32>
    %43 = tpu.concatenate %41, %42 in 0 : vector<2x16xf32>, vector<2x16xf32> -> vector<4x16xf32>
    %44 = tpu.concatenate %43, %38 in 1 : vector<4x16xf32>, vector<4x32xf32> -> vector<4x48xf32>
    %cst_13 = arith.constant dense<0.000000e+00> : vector<4x256xf32>
    %45 = tpu.matmul %44, %0, %cst_13 {dimension_numbers = #tpu.dot_dimension_numbers<[1], [0], [0], [1], [0, 0, 1, 1], [], []>} : vector<4x48xf32>, vector<48x256xf32>, vector<4x256xf32> -> vector<4x256xf32>
    %46 = vector.broadcast %1 : vector<1x256xf32> to vector<4x256xf32>
    %47 = arith.addf %45, %46 : vector<4x256xf32>
    %48 = vector.extract_strided_slice %47 {offsets = [0, 0], sizes = [2, 128], strides = [1, 1]} : vector<4x256xf32> to vector<2x128xf32>
    %49 = vector.extract_strided_slice %47 {offsets = [2, 128], sizes = [2, 128], strides = [1, 1]} : vector<4x256xf32> to vector<2x128xf32>
    %50 = tpu.concatenate %48, %49 in 0 : vector<2x128xf32>, vector<2x128xf32> -> vector<4x128xf32>
    %51 = vector.extract_strided_slice %50 {offsets = [0, 0], sizes = [4, 32], strides = [1, 1]} : vector<4x128xf32> to vector<4x32xf32>
    %52 = arith.negf %51 : vector<4x32xf32>
    %53 = math.exp %52 : vector<4x32xf32>
    %cst_14 = arith.constant 1.000000e+00 : f32
    %54 = vector.broadcast %cst_14 : f32 to vector<4x32xf32>
    %55 = arith.addf %54, %53 : vector<4x32xf32>
    %56 = arith.divf %54, %55 : vector<4x32xf32>
    %57 = vector.extract_strided_slice %50 {offsets = [0, 32], sizes = [4, 32], strides = [1, 1]} : vector<4x128xf32> to vector<4x32xf32>
    %58 = arith.negf %57 : vector<4x32xf32>
    %59 = math.exp %58 : vector<4x32xf32>
    %cst_15 = arith.constant 1.000000e+00 : f32
    %60 = vector.broadcast %cst_15 : f32 to vector<4x32xf32>
    %61 = arith.addf %60, %59 : vector<4x32xf32>
    %62 = arith.divf %60, %61 : vector<4x32xf32>
    %63 = vector.extract_strided_slice %50 {offsets = [0, 64], sizes = [4, 32], strides = [1, 1]} : vector<4x128xf32> to vector<4x32xf32>
    %64 = math.tanh %63 : vector<4x32xf32>
    %65 = vector.extract_strided_slice %50 {offsets = [0, 96], sizes = [4, 32], strides = [1, 1]} : vector<4x128xf32> to vector<4x32xf32>
    %66 = arith.negf %65 : vector<4x32xf32>
    %67 = math.exp %66 : vector<4x32xf32>
    %cst_16 = arith.constant 1.000000e+00 : f32
    %68 = vector.broadcast %cst_16 : f32 to vector<4x32xf32>
    %69 = arith.addf %68, %67 : vector<4x32xf32>
    %70 = arith.divf %68, %69 : vector<4x32xf32>
    %71 = arith.mulf %62, %36 : vector<4x32xf32>
    %72 = arith.mulf %56, %64 : vector<4x32xf32>
    %73 = arith.addf %71, %72 : vector<4x32xf32>
    %74 = math.tanh %73 : vector<4x32xf32>
    %75 = arith.mulf %70, %74 : vector<4x32xf32>
    %76 = vector.extract_strided_slice %75 {offsets = [0, 0], sizes = [2, 32], strides = [1, 1]} : vector<4x32xf32> to vector<2x32xf32>
    %77 = vector.extract_strided_slice %75 {offsets = [2, 0], sizes = [2, 32], strides = [1, 1]} : vector<4x32xf32> to vector<2x32xf32>
    %c4 = arith.constant 4 : index
    %c0_17 = arith.constant 0 : index
    %78 = vector.load %arg0[%c4, %c0_17] : memref<16x16xf32, #tpu.memory_space<vmem>>, vector<2x16xf32>
    %c10 = arith.constant 10 : index
    %c0_18 = arith.constant 0 : index
    %79 = vector.load %arg0[%c10, %c0_18] : memref<16x16xf32, #tpu.memory_space<vmem>>, vector<2x16xf32>
    %80 = tpu.concatenate %78, %79 in 0 : vector<2x16xf32>, vector<2x16xf32> -> vector<4x16xf32>
    %81 = tpu.concatenate %80, %75 in 1 : vector<4x16xf32>, vector<4x32xf32> -> vector<4x48xf32>
    %cst_19 = arith.constant dense<0.000000e+00> : vector<4x256xf32>
    %82 = tpu.matmul %81, %0, %cst_19 {dimension_numbers = #tpu.dot_dimension_numbers<[1], [0], [0], [1], [0, 0, 1, 1], [], []>} : vector<4x48xf32>, vector<48x256xf32>, vector<4x256xf32> -> vector<4x256xf32>
    %83 = vector.broadcast %1 : vector<1x256xf32> to vector<4x256xf32>
    %84 = arith.addf %82, %83 : vector<4x256xf32>
    %85 = vector.extract_strided_slice %84 {offsets = [0, 0], sizes = [2, 128], strides = [1, 1]} : vector<4x256xf32> to vector<2x128xf32>
    %86 = vector.extract_strided_slice %84 {offsets = [2, 128], sizes = [2, 128], strides = [1, 1]} : vector<4x256xf32> to vector<2x128xf32>
    %87 = tpu.concatenate %85, %86 in 0 : vector<2x128xf32>, vector<2x128xf32> -> vector<4x128xf32>
    %88 = vector.extract_strided_slice %87 {offsets = [0, 0], sizes = [4, 32], strides = [1, 1]} : vector<4x128xf32> to vector<4x32xf32>
    %89 = arith.negf %88 : vector<4x32xf32>
    %90 = math.exp %89 : vector<4x32xf32>
    %cst_20 = arith.constant 1.000000e+00 : f32
    %91 = vector.broadcast %cst_20 : f32 to vector<4x32xf32>
    %92 = arith.addf %91, %90 : vector<4x32xf32>
    %93 = arith.divf %91, %92 : vector<4x32xf32>
    %94 = vector.extract_strided_slice %87 {offsets = [0, 32], sizes = [4, 32], strides = [1, 1]} : vector<4x128xf32> to vector<4x32xf32>
    %95 = arith.negf %94 : vector<4x32xf32>
    %96 = math.exp %95 : vector<4x32xf32>
    %cst_21 = arith.constant 1.000000e+00 : f32
    %97 = vector.broadcast %cst_21 : f32 to vector<4x32xf32>
    %98 = arith.addf %97, %96 : vector<4x32xf32>
    %99 = arith.divf %97, %98 : vector<4x32xf32>
    %100 = vector.extract_strided_slice %87 {offsets = [0, 64], sizes = [4, 32], strides = [1, 1]} : vector<4x128xf32> to vector<4x32xf32>
    %101 = math.tanh %100 : vector<4x32xf32>
    %102 = vector.extract_strided_slice %87 {offsets = [0, 96], sizes = [4, 32], strides = [1, 1]} : vector<4x128xf32> to vector<4x32xf32>
    %103 = arith.negf %102 : vector<4x32xf32>
    %104 = math.exp %103 : vector<4x32xf32>
    %cst_22 = arith.constant 1.000000e+00 : f32
    %105 = vector.broadcast %cst_22 : f32 to vector<4x32xf32>
    %106 = arith.addf %105, %104 : vector<4x32xf32>
    %107 = arith.divf %105, %106 : vector<4x32xf32>
    %108 = arith.mulf %99, %73 : vector<4x32xf32>
    %109 = arith.mulf %93, %101 : vector<4x32xf32>
    %110 = arith.addf %108, %109 : vector<4x32xf32>
    %111 = math.tanh %110 : vector<4x32xf32>
    %112 = arith.mulf %107, %111 : vector<4x32xf32>
    %113 = vector.extract_strided_slice %112 {offsets = [0, 0], sizes = [2, 32], strides = [1, 1]} : vector<4x32xf32> to vector<2x32xf32>
    %114 = vector.extract_strided_slice %112 {offsets = [2, 0], sizes = [2, 32], strides = [1, 1]} : vector<4x32xf32> to vector<2x32xf32>
    %c6 = arith.constant 6 : index
    %c0_23 = arith.constant 0 : index
    %115 = vector.load %arg0[%c6, %c0_23] : memref<16x16xf32, #tpu.memory_space<vmem>>, vector<2x16xf32>
    %c8 = arith.constant 8 : index
    %c0_24 = arith.constant 0 : index
    %116 = vector.load %arg0[%c8, %c0_24] : memref<16x16xf32, #tpu.memory_space<vmem>>, vector<2x16xf32>
    %117 = tpu.concatenate %115, %116 in 0 : vector<2x16xf32>, vector<2x16xf32> -> vector<4x16xf32>
    %118 = tpu.concatenate %117, %112 in 1 : vector<4x16xf32>, vector<4x32xf32> -> vector<4x48xf32>
    %cst_25 = arith.constant dense<0.000000e+00> : vector<4x256xf32>
    %119 = tpu.matmul %118, %0, %cst_25 {dimension_numbers = #tpu.dot_dimension_numbers<[1], [0], [0], [1], [0, 0, 1, 1], [], []>} : vector<4x48xf32>, vector<48x256xf32>, vector<4x256xf32> -> vector<4x256xf32>
    %120 = vector.broadcast %1 : vector<1x256xf32> to vector<4x256xf32>
    %121 = arith.addf %119, %120 : vector<4x256xf32>
    %122 = vector.extract_strided_slice %121 {offsets = [0, 0], sizes = [2, 128], strides = [1, 1]} : vector<4x256xf32> to vector<2x128xf32>
    %123 = vector.extract_strided_slice %121 {offsets = [2, 128], sizes = [2, 128], strides = [1, 1]} : vector<4x256xf32> to vector<2x128xf32>
    %124 = tpu.concatenate %122, %123 in 0 : vector<2x128xf32>, vector<2x128xf32> -> vector<4x128xf32>
    %125 = vector.extract_strided_slice %124 {offsets = [0, 0], sizes = [4, 32], strides = [1, 1]} : vector<4x128xf32> to vector<4x32xf32>
    %126 = arith.negf %125 : vector<4x32xf32>
    %127 = math.exp %126 : vector<4x32xf32>
    %cst_26 = arith.constant 1.000000e+00 : f32
    %128 = vector.broadcast %cst_26 : f32 to vector<4x32xf32>
    %129 = arith.addf %128, %127 : vector<4x32xf32>
    %130 = arith.divf %128, %129 : vector<4x32xf32>
    %131 = vector.extract_strided_slice %124 {offsets = [0, 32], sizes = [4, 32], strides = [1, 1]} : vector<4x128xf32> to vector<4x32xf32>
    %132 = arith.negf %131 : vector<4x32xf32>
    %133 = math.exp %132 : vector<4x32xf32>
    %cst_27 = arith.constant 1.000000e+00 : f32
    %134 = vector.broadcast %cst_27 : f32 to vector<4x32xf32>
    %135 = arith.addf %134, %133 : vector<4x32xf32>
    %136 = arith.divf %134, %135 : vector<4x32xf32>
    %137 = vector.extract_strided_slice %124 {offsets = [0, 64], sizes = [4, 32], strides = [1, 1]} : vector<4x128xf32> to vector<4x32xf32>
    %138 = math.tanh %137 : vector<4x32xf32>
    %139 = vector.extract_strided_slice %124 {offsets = [0, 96], sizes = [4, 32], strides = [1, 1]} : vector<4x128xf32> to vector<4x32xf32>
    %140 = arith.negf %139 : vector<4x32xf32>
    %141 = math.exp %140 : vector<4x32xf32>
    %cst_28 = arith.constant 1.000000e+00 : f32
    %142 = vector.broadcast %cst_28 : f32 to vector<4x32xf32>
    %143 = arith.addf %142, %141 : vector<4x32xf32>
    %144 = arith.divf %142, %143 : vector<4x32xf32>
    %145 = arith.mulf %136, %110 : vector<4x32xf32>
    %146 = arith.mulf %130, %138 : vector<4x32xf32>
    %147 = arith.addf %145, %146 : vector<4x32xf32>
    %148 = math.tanh %147 : vector<4x32xf32>
    %149 = arith.mulf %144, %148 : vector<4x32xf32>
    %150 = vector.extract_strided_slice %149 {offsets = [0, 0], sizes = [2, 32], strides = [1, 1]} : vector<4x32xf32> to vector<2x32xf32>
    %151 = vector.extract_strided_slice %149 {offsets = [2, 0], sizes = [2, 32], strides = [1, 1]} : vector<4x32xf32> to vector<2x32xf32>
    %c8_29 = arith.constant 8 : index
    %c0_30 = arith.constant 0 : index
    %152 = vector.load %arg0[%c8_29, %c0_30] : memref<16x16xf32, #tpu.memory_space<vmem>>, vector<2x16xf32>
    %c6_31 = arith.constant 6 : index
    %c0_32 = arith.constant 0 : index
    %153 = vector.load %arg0[%c6_31, %c0_32] : memref<16x16xf32, #tpu.memory_space<vmem>>, vector<2x16xf32>
    %154 = tpu.concatenate %152, %153 in 0 : vector<2x16xf32>, vector<2x16xf32> -> vector<4x16xf32>
    %155 = tpu.concatenate %154, %149 in 1 : vector<4x16xf32>, vector<4x32xf32> -> vector<4x48xf32>
    %cst_33 = arith.constant dense<0.000000e+00> : vector<4x256xf32>
    %156 = tpu.matmul %155, %0, %cst_33 {dimension_numbers = #tpu.dot_dimension_numbers<[1], [0], [0], [1], [0, 0, 1, 1], [], []>} : vector<4x48xf32>, vector<48x256xf32>, vector<4x256xf32> -> vector<4x256xf32>
    %157 = vector.broadcast %1 : vector<1x256xf32> to vector<4x256xf32>
    %158 = arith.addf %156, %157 : vector<4x256xf32>
    %159 = vector.extract_strided_slice %158 {offsets = [0, 0], sizes = [2, 128], strides = [1, 1]} : vector<4x256xf32> to vector<2x128xf32>
    %160 = vector.extract_strided_slice %158 {offsets = [2, 128], sizes = [2, 128], strides = [1, 1]} : vector<4x256xf32> to vector<2x128xf32>
    %161 = tpu.concatenate %159, %160 in 0 : vector<2x128xf32>, vector<2x128xf32> -> vector<4x128xf32>
    %162 = vector.extract_strided_slice %161 {offsets = [0, 0], sizes = [4, 32], strides = [1, 1]} : vector<4x128xf32> to vector<4x32xf32>
    %163 = arith.negf %162 : vector<4x32xf32>
    %164 = math.exp %163 : vector<4x32xf32>
    %cst_34 = arith.constant 1.000000e+00 : f32
    %165 = vector.broadcast %cst_34 : f32 to vector<4x32xf32>
    %166 = arith.addf %165, %164 : vector<4x32xf32>
    %167 = arith.divf %165, %166 : vector<4x32xf32>
    %168 = vector.extract_strided_slice %161 {offsets = [0, 32], sizes = [4, 32], strides = [1, 1]} : vector<4x128xf32> to vector<4x32xf32>
    %169 = arith.negf %168 : vector<4x32xf32>
    %170 = math.exp %169 : vector<4x32xf32>
    %cst_35 = arith.constant 1.000000e+00 : f32
    %171 = vector.broadcast %cst_35 : f32 to vector<4x32xf32>
    %172 = arith.addf %171, %170 : vector<4x32xf32>
    %173 = arith.divf %171, %172 : vector<4x32xf32>
    %174 = vector.extract_strided_slice %161 {offsets = [0, 64], sizes = [4, 32], strides = [1, 1]} : vector<4x128xf32> to vector<4x32xf32>
    %175 = math.tanh %174 : vector<4x32xf32>
    %176 = vector.extract_strided_slice %161 {offsets = [0, 96], sizes = [4, 32], strides = [1, 1]} : vector<4x128xf32> to vector<4x32xf32>
    %177 = arith.negf %176 : vector<4x32xf32>
    %178 = math.exp %177 : vector<4x32xf32>
    %cst_36 = arith.constant 1.000000e+00 : f32
    %179 = vector.broadcast %cst_36 : f32 to vector<4x32xf32>
    %180 = arith.addf %179, %178 : vector<4x32xf32>
    %181 = arith.divf %179, %180 : vector<4x32xf32>
    %182 = arith.mulf %173, %147 : vector<4x32xf32>
    %183 = arith.mulf %167, %175 : vector<4x32xf32>
    %184 = arith.addf %182, %183 : vector<4x32xf32>
    %185 = math.tanh %184 : vector<4x32xf32>
    %186 = arith.mulf %181, %185 : vector<4x32xf32>
    %187 = vector.extract_strided_slice %186 {offsets = [0, 0], sizes = [2, 32], strides = [1, 1]} : vector<4x32xf32> to vector<2x32xf32>
    %188 = vector.extract_strided_slice %186 {offsets = [2, 0], sizes = [2, 32], strides = [1, 1]} : vector<4x32xf32> to vector<2x32xf32>
    %c10_37 = arith.constant 10 : index
    %c0_38 = arith.constant 0 : index
    %189 = vector.load %arg0[%c10_37, %c0_38] : memref<16x16xf32, #tpu.memory_space<vmem>>, vector<2x16xf32>
    %c4_39 = arith.constant 4 : index
    %c0_40 = arith.constant 0 : index
    %190 = vector.load %arg0[%c4_39, %c0_40] : memref<16x16xf32, #tpu.memory_space<vmem>>, vector<2x16xf32>
    %191 = tpu.concatenate %189, %190 in 0 : vector<2x16xf32>, vector<2x16xf32> -> vector<4x16xf32>
    %192 = tpu.concatenate %191, %186 in 1 : vector<4x16xf32>, vector<4x32xf32> -> vector<4x48xf32>
    %cst_41 = arith.constant dense<0.000000e+00> : vector<4x256xf32>
    %193 = tpu.matmul %192, %0, %cst_41 {dimension_numbers = #tpu.dot_dimension_numbers<[1], [0], [0], [1], [0, 0, 1, 1], [], []>} : vector<4x48xf32>, vector<48x256xf32>, vector<4x256xf32> -> vector<4x256xf32>
    %194 = vector.broadcast %1 : vector<1x256xf32> to vector<4x256xf32>
    %195 = arith.addf %193, %194 : vector<4x256xf32>
    %196 = vector.extract_strided_slice %195 {offsets = [0, 0], sizes = [2, 128], strides = [1, 1]} : vector<4x256xf32> to vector<2x128xf32>
    %197 = vector.extract_strided_slice %195 {offsets = [2, 128], sizes = [2, 128], strides = [1, 1]} : vector<4x256xf32> to vector<2x128xf32>
    %198 = tpu.concatenate %196, %197 in 0 : vector<2x128xf32>, vector<2x128xf32> -> vector<4x128xf32>
    %199 = vector.extract_strided_slice %198 {offsets = [0, 0], sizes = [4, 32], strides = [1, 1]} : vector<4x128xf32> to vector<4x32xf32>
    %200 = arith.negf %199 : vector<4x32xf32>
    %201 = math.exp %200 : vector<4x32xf32>
    %cst_42 = arith.constant 1.000000e+00 : f32
    %202 = vector.broadcast %cst_42 : f32 to vector<4x32xf32>
    %203 = arith.addf %202, %201 : vector<4x32xf32>
    %204 = arith.divf %202, %203 : vector<4x32xf32>
    %205 = vector.extract_strided_slice %198 {offsets = [0, 32], sizes = [4, 32], strides = [1, 1]} : vector<4x128xf32> to vector<4x32xf32>
    %206 = arith.negf %205 : vector<4x32xf32>
    %207 = math.exp %206 : vector<4x32xf32>
    %cst_43 = arith.constant 1.000000e+00 : f32
    %208 = vector.broadcast %cst_43 : f32 to vector<4x32xf32>
    %209 = arith.addf %208, %207 : vector<4x32xf32>
    %210 = arith.divf %208, %209 : vector<4x32xf32>
    %211 = vector.extract_strided_slice %198 {offsets = [0, 64], sizes = [4, 32], strides = [1, 1]} : vector<4x128xf32> to vector<4x32xf32>
    %212 = math.tanh %211 : vector<4x32xf32>
    %213 = vector.extract_strided_slice %198 {offsets = [0, 96], sizes = [4, 32], strides = [1, 1]} : vector<4x128xf32> to vector<4x32xf32>
    %214 = arith.negf %213 : vector<4x32xf32>
    %215 = math.exp %214 : vector<4x32xf32>
    %cst_44 = arith.constant 1.000000e+00 : f32
    %216 = vector.broadcast %cst_44 : f32 to vector<4x32xf32>
    %217 = arith.addf %216, %215 : vector<4x32xf32>
    %218 = arith.divf %216, %217 : vector<4x32xf32>
    %219 = arith.mulf %210, %184 : vector<4x32xf32>
    %220 = arith.mulf %204, %212 : vector<4x32xf32>
    %221 = arith.addf %219, %220 : vector<4x32xf32>
    %222 = math.tanh %221 : vector<4x32xf32>
    %223 = arith.mulf %218, %222 : vector<4x32xf32>
    %224 = vector.extract_strided_slice %223 {offsets = [0, 0], sizes = [2, 32], strides = [1, 1]} : vector<4x32xf32> to vector<2x32xf32>
    %225 = vector.extract_strided_slice %223 {offsets = [2, 0], sizes = [2, 32], strides = [1, 1]} : vector<4x32xf32> to vector<2x32xf32>
    %c12_45 = arith.constant 12 : index
    %c0_46 = arith.constant 0 : index
    %226 = vector.load %arg0[%c12_45, %c0_46] : memref<16x16xf32, #tpu.memory_space<vmem>>, vector<2x16xf32>
    %c2_47 = arith.constant 2 : index
    %c0_48 = arith.constant 0 : index
    %227 = vector.load %arg0[%c2_47, %c0_48] : memref<16x16xf32, #tpu.memory_space<vmem>>, vector<2x16xf32>
    %228 = tpu.concatenate %226, %227 in 0 : vector<2x16xf32>, vector<2x16xf32> -> vector<4x16xf32>
    %229 = tpu.concatenate %228, %223 in 1 : vector<4x16xf32>, vector<4x32xf32> -> vector<4x48xf32>
    %cst_49 = arith.constant dense<0.000000e+00> : vector<4x256xf32>
    %230 = tpu.matmul %229, %0, %cst_49 {dimension_numbers = #tpu.dot_dimension_numbers<[1], [0], [0], [1], [0, 0, 1, 1], [], []>} : vector<4x48xf32>, vector<48x256xf32>, vector<4x256xf32> -> vector<4x256xf32>
    %231 = vector.broadcast %1 : vector<1x256xf32> to vector<4x256xf32>
    %232 = arith.addf %230, %231 : vector<4x256xf32>
    %233 = vector.extract_strided_slice %232 {offsets = [0, 0], sizes = [2, 128], strides = [1, 1]} : vector<4x256xf32> to vector<2x128xf32>
    %234 = vector.extract_strided_slice %232 {offsets = [2, 128], sizes = [2, 128], strides = [1, 1]} : vector<4x256xf32> to vector<2x128xf32>
    %235 = tpu.concatenate %233, %234 in 0 : vector<2x128xf32>, vector<2x128xf32> -> vector<4x128xf32>
    %236 = vector.extract_strided_slice %235 {offsets = [0, 0], sizes = [4, 32], strides = [1, 1]} : vector<4x128xf32> to vector<4x32xf32>
    %237 = arith.negf %236 : vector<4x32xf32>
    %238 = math.exp %237 : vector<4x32xf32>
    %cst_50 = arith.constant 1.000000e+00 : f32
    %239 = vector.broadcast %cst_50 : f32 to vector<4x32xf32>
    %240 = arith.addf %239, %238 : vector<4x32xf32>
    %241 = arith.divf %239, %240 : vector<4x32xf32>
    %242 = vector.extract_strided_slice %235 {offsets = [0, 32], sizes = [4, 32], strides = [1, 1]} : vector<4x128xf32> to vector<4x32xf32>
    %243 = arith.negf %242 : vector<4x32xf32>
    %244 = math.exp %243 : vector<4x32xf32>
    %cst_51 = arith.constant 1.000000e+00 : f32
    %245 = vector.broadcast %cst_51 : f32 to vector<4x32xf32>
    %246 = arith.addf %245, %244 : vector<4x32xf32>
    %247 = arith.divf %245, %246 : vector<4x32xf32>
    %248 = vector.extract_strided_slice %235 {offsets = [0, 64], sizes = [4, 32], strides = [1, 1]} : vector<4x128xf32> to vector<4x32xf32>
    %249 = math.tanh %248 : vector<4x32xf32>
    %250 = vector.extract_strided_slice %235 {offsets = [0, 96], sizes = [4, 32], strides = [1, 1]} : vector<4x128xf32> to vector<4x32xf32>
    %251 = arith.negf %250 : vector<4x32xf32>
    %252 = math.exp %251 : vector<4x32xf32>
    %cst_52 = arith.constant 1.000000e+00 : f32
    %253 = vector.broadcast %cst_52 : f32 to vector<4x32xf32>
    %254 = arith.addf %253, %252 : vector<4x32xf32>
    %255 = arith.divf %253, %254 : vector<4x32xf32>
    %256 = arith.mulf %247, %221 : vector<4x32xf32>
    %257 = arith.mulf %241, %249 : vector<4x32xf32>
    %258 = arith.addf %256, %257 : vector<4x32xf32>
    %259 = math.tanh %258 : vector<4x32xf32>
    %260 = arith.mulf %255, %259 : vector<4x32xf32>
    %261 = vector.extract_strided_slice %260 {offsets = [0, 0], sizes = [2, 32], strides = [1, 1]} : vector<4x32xf32> to vector<2x32xf32>
    %262 = vector.extract_strided_slice %260 {offsets = [2, 0], sizes = [2, 32], strides = [1, 1]} : vector<4x32xf32> to vector<2x32xf32>
    %c14_53 = arith.constant 14 : index
    %c0_54 = arith.constant 0 : index
    %263 = vector.load %arg0[%c14_53, %c0_54] : memref<16x16xf32, #tpu.memory_space<vmem>>, vector<2x16xf32>
    %c0_55 = arith.constant 0 : index
    %c0_56 = arith.constant 0 : index
    %264 = vector.load %arg0[%c0_55, %c0_56] : memref<16x16xf32, #tpu.memory_space<vmem>>, vector<2x16xf32>
    %265 = tpu.concatenate %263, %264 in 0 : vector<2x16xf32>, vector<2x16xf32> -> vector<4x16xf32>
    %266 = tpu.concatenate %265, %260 in 1 : vector<4x16xf32>, vector<4x32xf32> -> vector<4x48xf32>
    %cst_57 = arith.constant dense<0.000000e+00> : vector<4x256xf32>
    %267 = tpu.matmul %266, %0, %cst_57 {dimension_numbers = #tpu.dot_dimension_numbers<[1], [0], [0], [1], [0, 0, 1, 1], [], []>} : vector<4x48xf32>, vector<48x256xf32>, vector<4x256xf32> -> vector<4x256xf32>
    %268 = vector.broadcast %1 : vector<1x256xf32> to vector<4x256xf32>
    %269 = arith.addf %267, %268 : vector<4x256xf32>
    %270 = vector.extract_strided_slice %269 {offsets = [0, 0], sizes = [2, 128], strides = [1, 1]} : vector<4x256xf32> to vector<2x128xf32>
    %271 = vector.extract_strided_slice %269 {offsets = [2, 128], sizes = [2, 128], strides = [1, 1]} : vector<4x256xf32> to vector<2x128xf32>
    %272 = tpu.concatenate %270, %271 in 0 : vector<2x128xf32>, vector<2x128xf32> -> vector<4x128xf32>
    %273 = vector.extract_strided_slice %272 {offsets = [0, 0], sizes = [4, 32], strides = [1, 1]} : vector<4x128xf32> to vector<4x32xf32>
    %274 = arith.negf %273 : vector<4x32xf32>
    %275 = math.exp %274 : vector<4x32xf32>
    %cst_58 = arith.constant 1.000000e+00 : f32
    %276 = vector.broadcast %cst_58 : f32 to vector<4x32xf32>
    %277 = arith.addf %276, %275 : vector<4x32xf32>
    %278 = arith.divf %276, %277 : vector<4x32xf32>
    %279 = vector.extract_strided_slice %272 {offsets = [0, 32], sizes = [4, 32], strides = [1, 1]} : vector<4x128xf32> to vector<4x32xf32>
    %280 = arith.negf %279 : vector<4x32xf32>
    %281 = math.exp %280 : vector<4x32xf32>
    %cst_59 = arith.constant 1.000000e+00 : f32
    %282 = vector.broadcast %cst_59 : f32 to vector<4x32xf32>
    %283 = arith.addf %282, %281 : vector<4x32xf32>
    %284 = arith.divf %282, %283 : vector<4x32xf32>
    %285 = vector.extract_strided_slice %272 {offsets = [0, 64], sizes = [4, 32], strides = [1, 1]} : vector<4x128xf32> to vector<4x32xf32>
    %286 = math.tanh %285 : vector<4x32xf32>
    %287 = vector.extract_strided_slice %272 {offsets = [0, 96], sizes = [4, 32], strides = [1, 1]} : vector<4x128xf32> to vector<4x32xf32>
    %288 = arith.negf %287 : vector<4x32xf32>
    %289 = math.exp %288 : vector<4x32xf32>
    %cst_60 = arith.constant 1.000000e+00 : f32
    %290 = vector.broadcast %cst_60 : f32 to vector<4x32xf32>
    %291 = arith.addf %290, %289 : vector<4x32xf32>
    %292 = arith.divf %290, %291 : vector<4x32xf32>
    %293 = arith.mulf %284, %258 : vector<4x32xf32>
    %294 = arith.mulf %278, %286 : vector<4x32xf32>
    %295 = arith.addf %293, %294 : vector<4x32xf32>
    %296 = math.tanh %295 : vector<4x32xf32>
    %297 = arith.mulf %292, %296 : vector<4x32xf32>
    %298 = vector.extract_strided_slice %297 {offsets = [0, 0], sizes = [2, 32], strides = [1, 1]} : vector<4x32xf32> to vector<2x32xf32>
    %299 = vector.extract_strided_slice %297 {offsets = [2, 0], sizes = [2, 32], strides = [1, 1]} : vector<4x32xf32> to vector<2x32xf32>
    %300 = tpu.concatenate %39, %299 in 1 : vector<2x32xf32>, vector<2x32xf32> -> vector<2x64xf32>
    %301 = tpu.concatenate %76, %262 in 1 : vector<2x32xf32>, vector<2x32xf32> -> vector<2x64xf32>
    %302 = tpu.concatenate %113, %225 in 1 : vector<2x32xf32>, vector<2x32xf32> -> vector<2x64xf32>
    %303 = tpu.concatenate %150, %188 in 1 : vector<2x32xf32>, vector<2x32xf32> -> vector<2x64xf32>
    %304 = tpu.concatenate %187, %151 in 1 : vector<2x32xf32>, vector<2x32xf32> -> vector<2x64xf32>
    %305 = tpu.concatenate %224, %114 in 1 : vector<2x32xf32>, vector<2x32xf32> -> vector<2x64xf32>
    %306 = tpu.concatenate %261, %77 in 1 : vector<2x32xf32>, vector<2x32xf32> -> vector<2x64xf32>
    %307 = tpu.concatenate %298, %40 in 1 : vector<2x32xf32>, vector<2x32xf32> -> vector<2x64xf32>
    %308 = tpu.concatenate %300, %301, %302, %303, %304, %305, %306, %307 in 0 : vector<2x64xf32>, vector<2x64xf32>, vector<2x64xf32>, vector<2x64xf32>, vector<2x64xf32>, vector<2x64xf32>, vector<2x64xf32>, vector<2x64xf32> -> vector<16x64xf32>
    %c0_61 = arith.constant 0 : index
    %c0_62 = arith.constant 0 : index
    %309 = vector.load %arg3[%c0_61, %c0_62] : memref<64x8xf32, #tpu.memory_space<vmem>>, vector<64x8xf32>
    %cst_63 = arith.constant dense<0.000000e+00> : vector<16x8xf32>
    %310 = tpu.matmul %308, %309, %cst_63 {dimension_numbers = #tpu.dot_dimension_numbers<[1], [0], [0], [1], [0, 0, 1, 1], [], []>} : vector<16x64xf32>, vector<64x8xf32>, vector<16x8xf32> -> vector<16x8xf32>
    %c0_64 = arith.constant 0 : index
    %c0_65 = arith.constant 0 : index
    %311 = vector.load %arg4[%c0_64, %c0_65] : memref<1x8xf32, #tpu.memory_space<vmem>>, vector<1x8xf32>
    %312 = vector.broadcast %311 : vector<1x8xf32> to vector<16x8xf32>
    %313 = arith.addf %310, %312 : vector<16x8xf32>
    %c0_66 = arith.constant 0 : index
    %c0_67 = arith.constant 0 : index
    %314 = vector.load %arg5[%c0_66, %c0_67] : memref<16x8xf32, #tpu.memory_space<vmem>>, vector<16x8xf32>
    tpu.vector_store %arg5[%c0_66, %c0_67], %313 {strides = array<i32>} : memref<16x8xf32, #tpu.memory_space<vmem>>, vector<16x8xf32>,
    return
  }
}

</mosaic_0001>

<llo_original>
// kernel: tpu_custom_call.1
$region0: #{tpu_custom_call.1}
  #allocation0 [shape = 'u32[]', space=smem, size = 0x4, offset = 0x4, fixed_abs, tag = 'smem constant byte address 0x4 - core index']
  #allocation1 [shape = 'u32[72,128]{1,0:T(1,128)}', space=vmem, size = 0x9000, scoped, tag = 'internal scratch']
  %s0 = inlined_call_operand.vmem [shape: f32[16,16], index: 0, kind: input, shape index: {}]
  %s1 = inlined_call_operand.hbm [shape: f32[48,256], index: 1, kind: input, shape index: {}]
  %s2 = inlined_call_operand.vmem [shape: f32[1,256], index: 2, kind: input, shape index: {}]
  %s3 = inlined_call_operand.vmem [shape: f32[64,8], index: 3, kind: input, shape index: {}]
  %s4 = inlined_call_operand.vmem [shape: f32[1,8], index: 4, kind: input, shape index: {}]
  %s5 = inlined_call_operand.vmem [shape: f32[16,8], index: 5, kind: output, shape index: {}]
  %s6 = sld [smem:[#allocation0]]
  $region34: #{tpu_custom_call.1} parent=0
    _
  %s8 = ssub.s32 1, %s6
  %s9 = scalar_select 0, %s8, %s6
  $region1: #{tpu_custom_call.1} parent=0
    #allocation2 [shape = 'u8[49152]{0}', space=vmem, size = 0xc000, scoped, tag = 'input window, operand 1, single buffered']
    #allocation3 [shape = 's32[1]{0}', space=sflag, size = 0x4, scoped, tag = 'scoped memory for tpu_custom_call.1']
    %10 = vsyncpa [#allocation3], 0
    // Predicated region
    $region2: #{tpu_custom_call.1} parent=1 // pred_check
      _
    $region3: #{tpu_custom_call.1} parent=1 // pred_check_branch
      %12 = sbr.rel (0) target = $region5
    $region4: #{tpu_custom_call.1} parent=1 // pred_region
      _
    $region5: #{tpu_custom_call.1} parent=1 // pred_fallthru
      _
    // Predicated region
    $region6: #{tpu_custom_call.1} parent=1 // pred_check
      _
    $region7: #{tpu_custom_call.1} parent=1 // pred_check_branch
      %14 = sbr.rel (0) target = $region9
    $region8: #{tpu_custom_call.1} parent=1 // pred_region
      %16 = vsyncadd [#allocation3], 0
      %s17 = sshll.u32 %s1, 4
      %s18 = int_to_ptr.hbm [resolvable:$true] %s17
      %s19 = sshll.u32 [#allocation2], 4
      %s20 = int_to_ptr.vmem [resolvable:$true] %s19
      %25 = dma.hbm_to_vmem [thread:$0]  %s18, 1536, %s20, [#allocation3], 256, 256, 16
    $region9: #{tpu_custom_call.1} parent=1 // pred_fallthru
      _
    // Predicated region
    $region10: #{tpu_custom_call.1} parent=1 // pred_check
      _
    $region11: #{tpu_custom_call.1} parent=1 // pred_check_branch
      %27 = sbr.rel (0) target = $region13
    $region12: #{tpu_custom_call.1} parent=1 // pred_region
      _
    $region13: #{tpu_custom_call.1} parent=1 // pred_fallthru
      _
    // Predicated region
    $region14: #{tpu_custom_call.1} parent=1 // pred_check
      _
    $region15: #{tpu_custom_call.1} parent=1 // pred_check_branch
      %29 = sbr.rel (0) target = $region17
    $region16: #{tpu_custom_call.1} parent=1 // pred_region
      _
    $region17: #{tpu_custom_call.1} parent=1 // pred_fallthru
      _
    // Predicated region
    $region18: #{tpu_custom_call.1} parent=1 // pred_check
      _
    $region19: #{tpu_custom_call.1} parent=1 // pred_check_branch
      %31 = sbr.rel (0) target = $region21
    $region20: #{tpu_custom_call.1} parent=1 // pred_region
      _
    $region21: #{tpu_custom_call.1} parent=1 // pred_fallthru
      _
    // Predicated region
    $region22: #{tpu_custom_call.1} parent=1 // pred_check
      _
    $region23: #{tpu_custom_call.1} parent=1 // pred_check_branch
      %33 = sbr.rel (0) target = $region25
    $region24: #{tpu_custom_call.1} parent=1 // pred_region
      %35 = dma.done [#allocation3], 1536
    $region25: #{tpu_custom_call.1} parent=1 // pred_fallthru
      _
    %v36 = vld [vmem:[#allocation2] sm:$0xff]
    %v37 = vld [vmem:[#allocation2 + $0x8] sm:$0xff]
    %v38 = vld [vmem:[#allocation2 + $0x10] sm:$0xff]
    %v39 = vld [vmem:[#allocation2 + $0x18] sm:$0xff]
    %v40 = vld [vmem:[#allocation2 + $0x20] sm:$0xff]
    %v41 = vld [vmem:[#allocation2 + $0x28] sm:$0xff]
    %v42 = vld [vmem:[#allocation2 + $0x30] sm:$0xff]
    %v43 = vld [vmem:[#allocation2 + $0x38] sm:$0xff]
    %v44 = vld [vmem:[#allocation2 + $0x40] sm:$0xff]
    %v45 = vld [vmem:[#allocation2 + $0x48] sm:$0xff]
    %v46 = vld [vmem:[#allocation2 + $0x50] sm:$0xff]
    %v47 = vld [vmem:[#allocation2 + $0x58] sm:$0xff]
    %v48 = vld [vmem:[%s2] sm:$0x3]
    %v49 = vld [vmem:[%s0] sm:$0x3]
    %v50 = vld [vmem:[%s0 + $0xe] sm:$0x3]
    %v52 = vrot.slane %v50, 6
    %vm54 = vcmask 1041408
    %v55 = vsel %vm54, %v49, %v52
    %vm56 = vcmask 130048
    %v57 = vsel %vm56, %v55, 0.0
    %v59 = vperm.slane %v48, 0
    %v60 = vperm.slane %v48, 1
    %vm63 = vcmask 392192
    %v65 = vsel %vm63, %v57, 0
    %67 = vmatpush.msra.mxu0 0.0
    %68 = vmatpush.msra.mxu0 0.0
    %69 = vmatpush.msra.mxu0 0.0
    %70 = vmatpush.msra.mxu0 0.0
    %71 = vmatpush.msra.mxu0 0.0
    %72 = vmatpush.msra.mxu0 0.0
    %73 = vmatpush.msra.mxu0 0.0
    %74 = vmatpush.msra.mxu0 0.0
    %75 = vmatpush.msra.mxu0 0.0
    %76 = vmatpush.msra.mxu0 0.0
    %77 = vmatpush.msra.mxu0 %v46
    %78 = vmatpush.msra.mxu0 %v44
    %79 = vmatpush.msra.mxu0 %v42
    %80 = vmatpush.msra.mxu0 %v40
    %81 = vmatpush.msra.mxu0 %v38
    %82 = vmatpush.msra.mxu0 %v36
    %83 = vmatmul.f32.gmra.mxu0 %v65
    %v84 = vpop.f32.mrf.mxu0
    %v85 = vadd.f32 %v59, %v84
    %86 = vdwg.mxu0
    %87 = vmatpush.msra.mxu0 0.0
    %88 = vmatpush.msra.mxu0 0.0
    %89 = vmatpush.msra.mxu0 0.0
    %90 = vmatpush.msra.mxu0 0.0
    %91 = vmatpush.msra.mxu0 0.0
    %92 = vmatpush.msra.mxu0 0.0
    %93 = vmatpush.msra.mxu0 0.0
    %94 = vmatpush.msra.mxu0 0.0
    %95 = vmatpush.msra.mxu0 0.0
    %96 = vmatpush.msra.mxu0 0.0
    %97 = vmatpush.msra.mxu0 %v47
    %98 = vmatpush.msra.mxu0 %v45
    %99 = vmatpush.msra.mxu0 %v43
    %100 = vmatpush.msra.mxu0 %v41
    %101 = vmatpush.msra.mxu0 %v39
    %102 = vmatpush.msra.mxu0 %v37
    %103 = vmatmul.f32.gmra.mxu0 %v65
    %v104 = vpop.f32.mrf.mxu0
    %v105 = vadd.f32 %v60, %v104
    %106 = vdwg.mxu0
    %v107 = vsel %vm54, %v85, %v105
    %v108 = vxor.u32 %v107, 2147483648
    %v109 = vmul.f32 %v108, 1.442695
    %v110 = vpow.pop %v109
    %v111 = vadd.f32 %v110, 1.0
    %v112 = vrcp.pop %v111
    %v113 = vmul.f32 %v111, %v112
    %v114 = vsub.f32 1.0, %v113
    %v115 = vmul.f32 %v112, %v114
    %v116 = vadd.f32 %v112, %v115
    %vm117 = vweird.f32 %v111
    %vm118 = vweird.f32 %v112
    %vm119 = vmor %vm117, %vm118
    %v120 = vsel %vm119, %v112, %v116
    %v121 = vand.u32 2147483647, %v111
    %vm122 = vcmp.eq.f32.partialorder %v121, 8.507059e+37
    %v123 = vand.u32 %v111, 2147483648
    %v124 = vor.u32 1.1754944e-38, %v123
    %v125 = vsel %vm122, %v124, %v120
    %v126 = vmul.f32 1.0, %v125
    %v127 = vtanh.pop %v107
    %v128 = vmul.f32 %v126, 0.0
    %130 = vrot.lane.b32.xlu0 %v127, 64
    %v131 = vpop.permute.xlu0 %130
    %v133 = vmul.f32 %v126, %v131
    %135 = vrot.lane.b32.xlu0 %v133, 32
    %v136 = vpop.permute.xlu0 %135
    %v138 = vadd.f32 %v128, %v136
    %v139 = vtanh.pop %v138
    %141 = vrot.lane.b32.xlu0 %v139, 64
    %v142 = vpop.permute.xlu0 %141
    %v144 = vmul.f32 %v126, %v142
    %v145 = vld [vmem:[%s0 + $0x2] sm:$0x3]
    %v146 = vld [vmem:[%s0 + $0xc] sm:$0x3]
    %v148 = vrot.slane %v146, 6
    %v150 = vsel %vm54, %v145, %v148
    %152 = vrot.lane.b32.xlu0 %v144, 48
    %v153 = vpop.permute.xlu0 %152
    %v155 = vsel %vm56, %v150, %v153
    %v157 = vsel %vm63, %v155, 0
    %159 = vmatpush.msra.mxu0 0.0
    %160 = vmatpush.msra.mxu0 0.0
    %161 = vmatpush.msra.mxu0 0.0
    %162 = vmatpush.msra.mxu0 0.0
    %163 = vmatpush.msra.mxu0 0.0
    %164 = vmatpush.msra.mxu0 0.0
    %165 = vmatpush.msra.mxu0 0.0
    %166 = vmatpush.msra.mxu0 0.0
    %167 = vmatpush.msra.mxu0 0.0
    %168 = vmatpush.msra.mxu0 0.0
    %169 = vmatpush.msra.mxu0 %v46
    %170 = vmatpush.msra.mxu0 %v44
    %171 = vmatpush.msra.mxu0 %v42
    %172 = vmatpush.msra.mxu0 %v40
    %173 = vmatpush.msra.mxu0 %v38
    %174 = vmatpush.msra.mxu0 %v36
    %175 = vmatmul.f32.gmra.mxu0 %v157
    %v176 = vpop.f32.mrf.mxu0
    %v177 = vadd.f32 %v59, %v176
    %178 = vdwg.mxu0
    %179 = vmatpush.msra.mxu0 0.0
    %180 = vmatpush.msra.mxu0 0.0
    %181 = vmatpush.msra.mxu0 0.0
    %182 = vmatpush.msra.mxu0 0.0
    %183 = vmatpush.msra.mxu0 0.0
    %184 = vmatpush.msra.mxu0 0.0
    %185 = vmatpush.msra.mxu0 0.0
    %186 = vmatpush.msra.mxu0 0.0
    %187 = vmatpush.msra.mxu0 0.0
    %188 = vmatpush.msra.mxu0 0.0
    %189 = vmatpush.msra.mxu0 %v47
    %190 = vmatpush.msra.mxu0 %v45
    %191 = vmatpush.msra.mxu0 %v43
    %192 = vmatpush.msra.mxu0 %v41
    %193 = vmatpush.msra.mxu0 %v39
    %194 = vmatpush.msra.mxu0 %v37
    %195 = vmatmul.f32.gmra.mxu0 %v157
    %v196 = vpop.f32.mrf.mxu0
    %v197 = vadd.f32 %v60, %v196
    %198 = vdwg.mxu0
    %v199 = vsel %vm54, %v177, %v197
    %v200 = vxor.u32 %v199, 2147483648
    %v201 = vmul.f32 %v200, 1.442695
    %v202 = vpow.pop %v201
    %v203 = vadd.f32 %v202, 1.0
    %v204 = vrcp.pop %v203
    %v205 = vmul.f32 %v203, %v204
    %v206 = vsub.f32 1.0, %v205
    %v207 = vmul.f32 %v204, %v206
    %v208 = vadd.f32 %v204, %v207
    %vm209 = vweird.f32 %v203
    %vm210 = vweird.f32 %v204
    %vm211 = vmor %vm209, %vm210
    %v212 = vsel %vm211, %v204, %v208
    %v213 = vand.u32 2147483647, %v203
    %vm214 = vcmp.eq.f32.partialorder %v213, 8.507059e+37
    %v215 = vand.u32 %v203, 2147483648
    %v216 = vor.u32 1.1754944e-38, %v215
    %v217 = vsel %vm214, %v216, %v212
    %v218 = vmul.f32 1.0, %v217
    %v219 = vtanh.pop %v199
    %v220 = vmul.f32 %v218, %v138
    %222 = vrot.lane.b32.xlu0 %v219, 64
    %v223 = vpop.permute.xlu0 %222
    %v225 = vmul.f32 %v218, %v223
    %227 = vrot.lane.b32.xlu0 %v225, 32
    %v228 = vpop.permute.xlu0 %227
    %v230 = vadd.f32 %v220, %v228
    %v231 = vtanh.pop %v230
    %233 = vrot.lane.b32.xlu0 %v231, 64
    %v234 = vpop.permute.xlu0 %233
    %v236 = vmul.f32 %v218, %v234
    %v237 = vld [vmem:[%s0 + $0x4] sm:$0x3]
    %v238 = vld [vmem:[%s0 + $0xa] sm:$0x3]
    %v240 = vrot.slane %v238, 6
    %v242 = vsel %vm54, %v237, %v240
    %244 = vrot.lane.b32.xlu0 %v236, 48
    %v245 = vpop.permute.xlu0 %244
    %v247 = vsel %vm56, %v242, %v245
    %v249 = vsel %vm63, %v247, 0
    %251 = vmatpush.msra.mxu0 0.0
    %252 = vmatpush.msra.mxu0 0.0
    %253 = vmatpush.msra.mxu0 0.0
    %254 = vmatpush.msra.mxu0 0.0
    %255 = vmatpush.msra.mxu0 0.0
    %256 = vmatpush.msra.mxu0 0.0
    %257 = vmatpush.msra.mxu0 0.0
    %258 = vmatpush.msra.mxu0 0.0
    %259 = vmatpush.msra.mxu0 0.0
    %260 = vmatpush.msra.mxu0 0.0
    %261 = vmatpush.msra.mxu0 %v46
    %262 = vmatpush.msra.mxu0 %v44
    %263 = vmatpush.msra.mxu0 %v42
    %264 = vmatpush.msra.mxu0 %v40
    %265 = vmatpush.msra.mxu0 %v38
    %266 = vmatpush.msra.mxu0 %v36
    %267 = vmatmul.f32.gmra.mxu0 %v249
    %v268 = vpop.f32.mrf.mxu0
    %v269 = vadd.f32 %v59, %v268
    %270 = vdwg.mxu0
    %271 = vmatpush.msra.mxu0 0.0
    %272 = vmatpush.msra.mxu0 0.0
    %273 = vmatpush.msra.mxu0 0.0
    %274 = vmatpush.msra.mxu0 0.0
    %275 = vmatpush.msra.mxu0 0.0
    %276 = vmatpush.msra.mxu0 0.0
    %277 = vmatpush.msra.mxu0 0.0
    %278 = vmatpush.msra.mxu0 0.0
    %279 = vmatpush.msra.mxu0 0.0
    %280 = vmatpush.msra.mxu0 0.0
    %281 = vmatpush.msra.mxu0 %v47
    %282 = vmatpush.msra.mxu0 %v45
    %283 = vmatpush.msra.mxu0 %v43
    %284 = vmatpush.msra.mxu0 %v41
    %285 = vmatpush.msra.mxu0 %v39
    %286 = vmatpush.msra.mxu0 %v37
    %287 = vmatmul.f32.gmra.mxu0 %v249
    %v288 = vpop.f32.mrf.mxu0
    %v289 = vadd.f32 %v60, %v288
    %290 = vdwg.mxu0
    %v291 = vsel %vm54, %v269, %v289
    %v292 = vxor.u32 %v291, 2147483648
    %v293 = vmul.f32 %v292, 1.442695
    %v294 = vpow.pop %v293
    %v295 = vadd.f32 %v294, 1.0
    %v296 = vrcp.pop %v295
    %v297 = vmul.f32 %v295, %v296
    %v298 = vsub.f32 1.0, %v297
    %v299 = vmul.f32 %v296, %v298
    %v300 = vadd.f32 %v296, %v299
    %vm301 = vweird.f32 %v295
    %vm302 = vweird.f32 %v296
    %vm303 = vmor %vm301, %vm302
    %v304 = vsel %vm303, %v296, %v300
    %v305 = vand.u32 2147483647, %v295
    %vm306 = vcmp.eq.f32.partialorder %v305, 8.507059e+37
    %v307 = vand.u32 %v295, 2147483648
    %v308 = vor.u32 1.1754944e-38, %v307
    %v309 = vsel %vm306, %v308, %v304
    %v310 = vmul.f32 1.0, %v309
    %v311 = vtanh.pop %v291
    %v312 = vmul.f32 %v310, %v230
    %314 = vrot.lane.b32.xlu0 %v311, 64
    %v315 = vpop.permute.xlu0 %314
    %v317 = vmul.f32 %v310, %v315
    %319 = vrot.lane.b32.xlu0 %v317, 32
    %v320 = vpop.permute.xlu0 %319
    %v322 = vadd.f32 %v312, %v320
    %v323 = vtanh.pop %v322
    %325 = vrot.lane.b32.xlu0 %v323, 64
    %v326 = vpop.permute.xlu0 %325
    %v328 = vmul.f32 %v310, %v326
    %v329 = vld [vmem:[%s0 + $0x6] sm:$0x3]
    %v330 = vld [vmem:[%s0 + $0x8] sm:$0x3]
    %v332 = vrot.slane %v330, 6
    %v334 = vsel %vm54, %v329, %v332
    %336 = vrot.lane.b32.xlu0 %v328, 48
    %v337 = vpop.permute.xlu0 %336
    %v339 = vsel %vm56, %v334, %v337
    %v341 = vsel %vm63, %v339, 0
    %343 = vmatpush.msra.mxu0 0.0
    %344 = vmatpush.msra.mxu0 0.0
    %345 = vmatpush.msra.mxu0 0.0
    %346 = vmatpush.msra.mxu0 0.0
    %347 = vmatpush.msra.mxu0 0.0
    %348 = vmatpush.msra.mxu0 0.0
    %349 = vmatpush.msra.mxu0 0.0
    %350 = vmatpush.msra.mxu0 0.0
    %351 = vmatpush.msra.mxu0 0.0
    %352 = vmatpush.msra.mxu0 0.0
    %353 = vmatpush.msra.mxu0 %v46
    %354 = vmatpush.msra.mxu0 %v44
    %355 = vmatpush.msra.mxu0 %v42
    %356 = vmatpush.msra.mxu0 %v40
    %357 = vmatpush.msra.mxu0 %v38
    %358 = vmatpush.msra.mxu0 %v36
    %359 = vmatmul.f32.gmra.mxu0 %v341
    %v360 = vpop.f32.mrf.mxu0
    %v361 = vadd.f32 %v59, %v360
    %362 = vdwg.mxu0
    %363 = vmatpush.msra.mxu0 0.0
    %364 = vmatpush.msra.mxu0 0.0
    %365 = vmatpush.msra.mxu0 0.0
    %366 = vmatpush.msra.mxu0 0.0
    %367 = vmatpush.msra.mxu0 0.0
    %368 = vmatpush.msra.mxu0 0.0
    %369 = vmatpush.msra.mxu0 0.0
    %370 = vmatpush.msra.mxu0 0.0
    %371 = vmatpush.msra.mxu0 0.0
    %372 = vmatpush.msra.mxu0 0.0
    %373 = vmatpush.msra.mxu0 %v47
    %374 = vmatpush.msra.mxu0 %v45
    %375 = vmatpush.msra.mxu0 %v43
    %376 = vmatpush.msra.mxu0 %v41
    %377 = vmatpush.msra.mxu0 %v39
    %378 = vmatpush.msra.mxu0 %v37
    %379 = vmatmul.f32.gmra.mxu0 %v341
    %v380 = vpop.f32.mrf.mxu0
    %v381 = vadd.f32 %v60, %v380
    %382 = vdwg.mxu0
    %v383 = vsel %vm54, %v361, %v381
    %v384 = vxor.u32 %v383, 2147483648
    %v385 = vmul.f32 %v384, 1.442695
    %v386 = vpow.pop %v385
    %v387 = vadd.f32 %v386, 1.0
    %v388 = vrcp.pop %v387
    %v389 = vmul.f32 %v387, %v388
    %v390 = vsub.f32 1.0, %v389
    %v391 = vmul.f32 %v388, %v390
    %v392 = vadd.f32 %v388, %v391
    %vm393 = vweird.f32 %v387
    %vm394 = vweird.f32 %v388
    %vm395 = vmor %vm393, %vm394
    %v396 = vsel %vm395, %v388, %v392
    %v397 = vand.u32 2147483647, %v387
    %vm398 = vcmp.eq.f32.partialorder %v397, 8.507059e+37
    %v399 = vand.u32 %v387, 2147483648
    %v400 = vor.u32 1.1754944e-38, %v399
    %v401 = vsel %vm398, %v400, %v396
    %v402 = vmul.f32 1.0, %v401
    %v403 = vtanh.pop %v383
    %v404 = vmul.f32 %v402, %v322
    %406 = vrot.lane.b32.xlu0 %v403, 64
    %v407 = vpop.permute.xlu0 %406
    %v409 = vmul.f32 %v402, %v407
    %411 = vrot.lane.b32.xlu0 %v409, 32
    %v412 = vpop.permute.xlu0 %411
    %v414 = vadd.f32 %v404, %v412
    %v415 = vtanh.pop %v414
    %417 = vrot.lane.b32.xlu0 %v415, 64
    %v418 = vpop.permute.xlu0 %417
    %v420 = vmul.f32 %v402, %v418
    %v422 = vrot.slane %v329, 6
    %v424 = vsel %vm54, %v330, %v422
    %426 = vrot.lane.b32.xlu0 %v420, 48
    %v427 = vpop.permute.xlu0 %426
    %v429 = vsel %vm56, %v424, %v427
    %v431 = vsel %vm63, %v429, 0
    %433 = vmatpush.msra.mxu0 0.0
    %434 = vmatpush.msra.mxu0 0.0
    %435 = vmatpush.msra.mxu0 0.0
    %436 = vmatpush.msra.mxu0 0.0
    %437 = vmatpush.msra.mxu0 0.0
    %438 = vmatpush.msra.mxu0 0.0
    %439 = vmatpush.msra.mxu0 0.0
    %440 = vmatpush.msra.mxu0 0.0
    %441 = vmatpush.msra.mxu0 0.0
    %442 = vmatpush.msra.mxu0 0.0
    %443 = vmatpush.msra.mxu0 %v46
    %444 = vmatpush.msra.mxu0 %v44
    %445 = vmatpush.msra.mxu0 %v42
    %446 = vmatpush.msra.mxu0 %v40
    %447 = vmatpush.msra.mxu0 %v38
    %448 = vmatpush.msra.mxu0 %v36
    %449 = vmatmul.f32.gmra.mxu0 %v431
    %v450 = vpop.f32.mrf.mxu0
    %v451 = vadd.f32 %v59, %v450
    %452 = vdwg.mxu0
    %453 = vmatpush.msra.mxu0 0.0
    %454 = vmatpush.msra.mxu0 0.0
    %455 = vmatpush.msra.mxu0 0.0
    %456 = vmatpush.msra.mxu0 0.0
    %457 = vmatpush.msra.mxu0 0.0
    %458 = vmatpush.msra.mxu0 0.0
    %459 = vmatpush.msra.mxu0 0.0
    %460 = vmatpush.msra.mxu0 0.0
    %461 = vmatpush.msra.mxu0 0.0
    %462 = vmatpush.msra.mxu0 0.0
    %463 = vmatpush.msra.mxu0 %v47
    %464 = vmatpush.msra.mxu0 %v45
    %465 = vmatpush.msra.mxu0 %v43
    %466 = vmatpush.msra.mxu0 %v41
    %467 = vmatpush.msra.mxu0 %v39
    %468 = vmatpush.msra.mxu0 %v37
    %469 = vmatmul.f32.gmra.mxu0 %v431
    %v470 = vpop.f32.mrf.mxu0
    %v471 = vadd.f32 %v60, %v470
    %472 = vdwg.mxu0
    %v473 = vsel %vm54, %v451, %v471
    %v474 = vxor.u32 %v473, 2147483648
    %v475 = vmul.f32 %v474, 1.442695
    %v476 = vpow.pop %v475
    %v477 = vadd.f32 %v476, 1.0
    %v478 = vrcp.pop %v477
    %v479 = vmul.f32 %v477, %v478
    %v480 = vsub.f32 1.0, %v479
    %v481 = vmul.f32 %v478, %v480
    %v482 = vadd.f32 %v478, %v481
    %vm483 = vweird.f32 %v477
    %vm484 = vweird.f32 %v478
    %vm485 = vmor %vm483, %vm484
    %v486 = vsel %vm485, %v478, %v482
    %v487 = vand.u32 2147483647, %v477
    %vm488 = vcmp.eq.f32.partialorder %v487, 8.507059e+37
    %v489 = vand.u32 %v477, 2147483648
    %v490 = vor.u32 1.1754944e-38, %v489
    %v491 = vsel %vm488, %v490, %v486
    %v492 = vmul.f32 1.0, %v491
    %v493 = vtanh.pop %v473
    %v494 = vmul.f32 %v492, %v414
    %496 = vrot.lane.b32.xlu0 %v493, 64
    %v497 = vpop.permute.xlu0 %496
    %v499 = vmul.f32 %v492, %v497
    %501 = vrot.lane.b32.xlu0 %v499, 32
    %v502 = vpop.permute.xlu0 %501
    %v504 = vadd.f32 %v494, %v502
    %v505 = vtanh.pop %v504
    %507 = vrot.lane.b32.xlu0 %v505, 64
    %v508 = vpop.permute.xlu0 %507
    %v510 = vmul.f32 %v492, %v508
    %v512 = vrot.slane %v237, 6
    %v514 = vsel %vm54, %v238, %v512
    %516 = vrot.lane.b32.xlu0 %v510, 48
    %v517 = vpop.permute.xlu0 %516
    %v519 = vsel %vm56, %v514, %v517
    %v521 = vsel %vm63, %v519, 0
    %523 = vmatpush.msra.mxu0 0.0
    %524 = vmatpush.msra.mxu0 0.0
    %525 = vmatpush.msra.mxu0 0.0
    %526 = vmatpush.msra.mxu0 0.0
    %527 = vmatpush.msra.mxu0 0.0
    %528 = vmatpush.msra.mxu0 0.0
    %529 = vmatpush.msra.mxu0 0.0
    %530 = vmatpush.msra.mxu0 0.0
    %531 = vmatpush.msra.mxu0 0.0
    %532 = vmatpush.msra.mxu0 0.0
    %533 = vmatpush.msra.mxu0 %v46
    %534 = vmatpush.msra.mxu0 %v44
    %535 = vmatpush.msra.mxu0 %v42
    %536 = vmatpush.msra.mxu0 %v40
    %537 = vmatpush.msra.mxu0 %v38
    %538 = vmatpush.msra.mxu0 %v36
    %539 = vmatmul.f32.gmra.mxu0 %v521
    %v540 = vpop.f32.mrf.mxu0
    %v541 = vadd.f32 %v59, %v540
    %542 = vdwg.mxu0
    %543 = vmatpush.msra.mxu0 0.0
    %544 = vmatpush.msra.mxu0 0.0
    %545 = vmatpush.msra.mxu0 0.0
    %546 = vmatpush.msra.mxu0 0.0
    %547 = vmatpush.msra.mxu0 0.0
    %548 = vmatpush.msra.mxu0 0.0
    %549 = vmatpush.msra.mxu0 0.0
    %550 = vmatpush.msra.mxu0 0.0
    %551 = vmatpush.msra.mxu0 0.0
    %552 = vmatpush.msra.mxu0 0.0
    %553 = vmatpush.msra.mxu0 %v47
    %554 = vmatpush.msra.mxu0 %v45
    %555 = vmatpush.msra.mxu0 %v43
    %556 = vmatpush.msra.mxu0 %v41
    %557 = vmatpush.msra.mxu0 %v39
    %558 = vmatpush.msra.mxu0 %v37
    %559 = vmatmul.f32.gmra.mxu0 %v521
    %v560 = vpop.f32.mrf.mxu0
    %v561 = vadd.f32 %v60, %v560
    %562 = vdwg.mxu0
    %v563 = vsel %vm54, %v541, %v561
    %v564 = vxor.u32 %v563, 2147483648
    %v565 = vmul.f32 %v564, 1.442695
    %v566 = vpow.pop %v565
    %v567 = vadd.f32 %v566, 1.0
    %v568 = vrcp.pop %v567
    %v569 = vmul.f32 %v567, %v568
    %v570 = vsub.f32 1.0, %v569
    %v571 = vmul.f32 %v568, %v570
    %v572 = vadd.f32 %v568, %v571
    %vm573 = vweird.f32 %v567
    %vm574 = vweird.f32 %v568
    %vm575 = vmor %vm573, %vm574
    %v576 = vsel %vm575, %v568, %v572
    %v577 = vand.u32 2147483647, %v567
    %vm578 = vcmp.eq.f32.partialorder %v577, 8.507059e+37
    %v579 = vand.u32 %v567, 2147483648
    %v580 = vor.u32 1.1754944e-38, %v579
    %v581 = vsel %vm578, %v580, %v576
    %v582 = vmul.f32 1.0, %v581
    %v583 = vtanh.pop %v563
    %v584 = vmul.f32 %v582, %v504
    %586 = vrot.lane.b32.xlu0 %v583, 64
    %v587 = vpop.permute.xlu0 %586
    %v589 = vmul.f32 %v582, %v587
    %591 = vrot.lane.b32.xlu0 %v589, 32
    %v592 = vpop.permute.xlu0 %591
    %v594 = vadd.f32 %v584, %v592
    %v595 = vtanh.pop %v594
    %597 = vrot.lane.b32.xlu0 %v595, 64
    %v598 = vpop.permute.xlu0 %597
    %v600 = vmul.f32 %v582, %v598
    %v602 = vrot.slane %v145, 6
    %v604 = vsel %vm54, %v146, %v602
    %606 = vrot.lane.b32.xlu0 %v600, 48
    %v607 = vpop.permute.xlu0 %606
    %v609 = vsel %vm56, %v604, %v607
    %v611 = vsel %vm63, %v609, 0
    %613 = vmatpush.msra.mxu0 0.0
    %614 = vmatpush.msra.mxu0 0.0
    %615 = vmatpush.msra.mxu0 0.0
    %616 = vmatpush.msra.mxu0 0.0
    %617 = vmatpush.msra.mxu0 0.0
    %618 = vmatpush.msra.mxu0 0.0
    %619 = vmatpush.msra.mxu0 0.0
    %620 = vmatpush.msra.mxu0 0.0
    %621 = vmatpush.msra.mxu0 0.0
    %622 = vmatpush.msra.mxu0 0.0
    %623 = vmatpush.msra.mxu0 %v46
    %624 = vmatpush.msra.mxu0 %v44
    %625 = vmatpush.msra.mxu0 %v42
    %626 = vmatpush.msra.mxu0 %v40
    %627 = vmatpush.msra.mxu0 %v38
    %628 = vmatpush.msra.mxu0 %v36
    %629 = vmatmul.f32.gmra.mxu0 %v611
    %v630 = vpop.f32.mrf.mxu0
    %v631 = vadd.f32 %v59, %v630
    %632 = vdwg.mxu0
    %633 = vmatpush.msra.mxu0 0.0
    %634 = vmatpush.msra.mxu0 0.0
    %635 = vmatpush.msra.mxu0 0.0
    %636 = vmatpush.msra.mxu0 0.0
    %637 = vmatpush.msra.mxu0 0.0
    %638 = vmatpush.msra.mxu0 0.0
    %639 = vmatpush.msra.mxu0 0.0
    %640 = vmatpush.msra.mxu0 0.0
    %641 = vmatpush.msra.mxu0 0.0
    %642 = vmatpush.msra.mxu0 0.0
    %643 = vmatpush.msra.mxu0 %v47
    %644 = vmatpush.msra.mxu0 %v45
    %645 = vmatpush.msra.mxu0 %v43
    %646 = vmatpush.msra.mxu0 %v41
    %647 = vmatpush.msra.mxu0 %v39
    %648 = vmatpush.msra.mxu0 %v37
    %649 = vmatmul.f32.gmra.mxu0 %v611
    %v650 = vpop.f32.mrf.mxu0
    %v651 = vadd.f32 %v60, %v650
    %652 = vdwg.mxu0
    %v653 = vsel %vm54, %v631, %v651
    %v654 = vxor.u32 %v653, 2147483648
    %v655 = vmul.f32 %v654, 1.442695
    %v656 = vpow.pop %v655
    %v657 = vadd.f32 %v656, 1.0
    %v658 = vrcp.pop %v657
    %v659 = vmul.f32 %v657, %v658
    %v660 = vsub.f32 1.0, %v659
    %v661 = vmul.f32 %v658, %v660
    %v662 = vadd.f32 %v658, %v661
    %vm663 = vweird.f32 %v657
    %vm664 = vweird.f32 %v658
    %vm665 = vmor %vm663, %vm664
    %v666 = vsel %vm665, %v658, %v662
    %v667 = vand.u32 2147483647, %v657
    %vm668 = vcmp.eq.f32.partialorder %v667, 8.507059e+37
    %v669 = vand.u32 %v657, 2147483648
    %v670 = vor.u32 1.1754944e-38, %v669
    %v671 = vsel %vm668, %v670, %v666
    %v672 = vmul.f32 1.0, %v671
    %v673 = vtanh.pop %v653
    %v674 = vmul.f32 %v672, %v594
    %676 = vrot.lane.b32.xlu0 %v673, 64
    %v677 = vpop.permute.xlu0 %676
    %v679 = vmul.f32 %v672, %v677
    %681 = vrot.lane.b32.xlu0 %v679, 32
    %v682 = vpop.permute.xlu0 %681
    %v684 = vadd.f32 %v674, %v682
    %v685 = vtanh.pop %v684
    %687 = vrot.lane.b32.xlu0 %v685, 64
    %v688 = vpop.permute.xlu0 %687
    %v690 = vmul.f32 %v672, %v688
    %v692 = vrot.slane %v49, 6
    %v694 = vsel %vm54, %v50, %v692
    %696 = vrot.lane.b32.xlu0 %v690, 48
    %v697 = vpop.permute.xlu0 %696
    %v699 = vsel %vm56, %v694, %v697
    %v701 = vsel %vm63, %v699, 0
    %703 = vmatpush.msra.mxu0 0.0
    %704 = vmatpush.msra.mxu0 0.0
    %705 = vmatpush.msra.mxu0 0.0
    %706 = vmatpush.msra.mxu0 0.0
    %707 = vmatpush.msra.mxu0 0.0
    %708 = vmatpush.msra.mxu0 0.0
    %709 = vmatpush.msra.mxu0 0.0
    %710 = vmatpush.msra.mxu0 0.0
    %711 = vmatpush.msra.mxu0 0.0
    %712 = vmatpush.msra.mxu0 0.0
    %713 = vmatpush.msra.mxu0 %v46
    %714 = vmatpush.msra.mxu0 %v44
    %715 = vmatpush.msra.mxu0 %v42
    %716 = vmatpush.msra.mxu0 %v40
    %717 = vmatpush.msra.mxu0 %v38
    %718 = vmatpush.msra.mxu0 %v36
    %719 = vmatmul.f32.gmra.mxu0 %v701
    %v720 = vpop.f32.mrf.mxu0
    %v721 = vadd.f32 %v59, %v720
    %722 = vdwg.mxu0
    %723 = vmatpush.msra.mxu0 0.0
    %724 = vmatpush.msra.mxu0 0.0
    %725 = vmatpush.msra.mxu0 0.0
    %726 = vmatpush.msra.mxu0 0.0
    %727 = vmatpush.msra.mxu0 0.0
    %728 = vmatpush.msra.mxu0 0.0
    %729 = vmatpush.msra.mxu0 0.0
    %730 = vmatpush.msra.mxu0 0.0
    %731 = vmatpush.msra.mxu0 0.0
    %732 = vmatpush.msra.mxu0 0.0
    %733 = vmatpush.msra.mxu0 %v47
    %734 = vmatpush.msra.mxu0 %v45
    %735 = vmatpush.msra.mxu0 %v43
    %736 = vmatpush.msra.mxu0 %v41
    %737 = vmatpush.msra.mxu0 %v39
    %738 = vmatpush.msra.mxu0 %v37
    %739 = vmatmul.f32.gmra.mxu0 %v701
    %v740 = vpop.f32.mrf.mxu0
    %v741 = vadd.f32 %v60, %v740
    %742 = vdwg.mxu0
    %v743 = vsel %vm54, %v721, %v741
    %v744 = vxor.u32 %v743, 2147483648
    %v745 = vmul.f32 %v744, 1.442695
    %v746 = vpow.pop %v745
    %v747 = vadd.f32 %v746, 1.0
    %v748 = vrcp.pop %v747
    %v749 = vmul.f32 %v747, %v748
    %v750 = vsub.f32 1.0, %v749
    %v751 = vmul.f32 %v748, %v750
    %v752 = vadd.f32 %v748, %v751
    %vm753 = vweird.f32 %v747
    %vm754 = vweird.f32 %v748
    %vm755 = vmor %vm753, %vm754
    %v756 = vsel %vm755, %v748, %v752
    %v757 = vand.u32 2147483647, %v747
    %vm758 = vcmp.eq.f32.partialorder %v757, 8.507059e+37
    %v759 = vand.u32 %v747, 2147483648
    %v760 = vor.u32 1.1754944e-38, %v759
    %v761 = vsel %vm758, %v760, %v756
    %v762 = vmul.f32 1.0, %v761
    %v763 = vtanh.pop %v743
    %v764 = vmul.f32 %v762, %v684
    %766 = vrot.lane.b32.xlu0 %v763, 64
    %v767 = vpop.permute.xlu0 %766
    %v769 = vmul.f32 %v762, %v767
    %771 = vrot.lane.b32.xlu0 %v769, 32
    %v772 = vpop.permute.xlu0 %771
    %v774 = vadd.f32 %v764, %v772
    %v775 = vtanh.pop %v774
    %777 = vrot.lane.b32.xlu0 %v775, 64
    %v778 = vpop.permute.xlu0 %777
    %v780 = vmul.f32 %v762, %v778
    %781 = vrot.lane.b32.xlu0 %v144, 32
    %v782 = vpop.permute.xlu0 %781
    %v785 = vrot.slane %v780, 2
    %786 = vrot.lane.b32.xlu0 %v785, 64
    %v787 = vpop.permute.xlu0 %786
    %vm789 = vcmask 261120
    %v790 = vsel %vm789, %v782, %v787
    %791 = vrot.lane.b32.xlu0 %v236, 32
    %v792 = vpop.permute.xlu0 %791
    %v794 = vrot.slane %v690, 2
    %795 = vrot.lane.b32.xlu0 %v794, 64
    %v796 = vpop.permute.xlu0 %795
    %v798 = vsel %vm789, %v792, %v796
    %799 = vrot.lane.b32.xlu0 %v328, 32
    %v800 = vpop.permute.xlu0 %799
    %v802 = vrot.slane %v600, 2
    %803 = vrot.lane.b32.xlu0 %v802, 64
    %v804 = vpop.permute.xlu0 %803
    %v806 = vsel %vm789, %v800, %v804
    %807 = vrot.lane.b32.xlu0 %v420, 32
    %v808 = vpop.permute.xlu0 %807
    %v810 = vrot.slane %v510, 2
    %811 = vrot.lane.b32.xlu0 %v810, 64
    %v812 = vpop.permute.xlu0 %811
    %v814 = vsel %vm789, %v808, %v812
    %815 = vrot.lane.b32.xlu0 %v510, 32
    %v816 = vpop.permute.xlu0 %815
    %v818 = vrot.slane %v420, 2
    %819 = vrot.lane.b32.xlu0 %v818, 64
    %v820 = vpop.permute.xlu0 %819
    %v822 = vsel %vm789, %v816, %v820
    %823 = vrot.lane.b32.xlu0 %v600, 32
    %v824 = vpop.permute.xlu0 %823
    %v826 = vrot.slane %v328, 2
    %827 = vrot.lane.b32.xlu0 %v826, 64
    %v828 = vpop.permute.xlu0 %827
    %v830 = vsel %vm789, %v824, %v828
    %831 = vrot.lane.b32.xlu0 %v690, 32
    %v832 = vpop.permute.xlu0 %831
    %v834 = vrot.slane %v236, 2
    %835 = vrot.lane.b32.xlu0 %v834, 64
    %v836 = vpop.permute.xlu0 %835
    %v838 = vsel %vm789, %v832, %v836
    %839 = vrot.lane.b32.xlu0 %v780, 32
    %v840 = vpop.permute.xlu0 %839
    %v842 = vrot.slane %v144, 2
    %843 = vrot.lane.b32.xlu0 %v842, 64
    %v844 = vpop.permute.xlu0 %843
    %v846 = vsel %vm789, %v840, %v844
    %v848 = vrot.slane %v798, 6
    %v851 = vrot.slane %v806, 4
    %v854 = vrot.slane %v814, 2
    %v857 = vrot.slane %v830, 6
    %v860 = vrot.slane %v838, 4
    %v863 = vrot.slane %v846, 2
    %v865 = vsel %vm54, %v790, %v848
    %vm866 = vcmask 1043456
    %v867 = vsel %vm866, %v865, %v851
    %vm868 = vcmask 1045504
    %v869 = vsel %vm868, %v867, %v854
    %v870 = vsel %vm54, %v822, %v857
    %v871 = vsel %vm866, %v870, %v860
    %v872 = vsel %vm868, %v871, %v863
    %v873 = vld [vmem:[%s3] sm:$0xff]
    %v874 = vld [vmem:[%s3 + $0x8] sm:$0xff]
    %v875 = vld [vmem:[%s3 + $0x10] sm:$0xff]
    %v876 = vld [vmem:[%s3 + $0x18] sm:$0xff]
    %v877 = vld [vmem:[%s3 + $0x20] sm:$0xff]
    %v878 = vld [vmem:[%s3 + $0x28] sm:$0xff]
    %v879 = vld [vmem:[%s3 + $0x30] sm:$0xff]
    %v880 = vld [vmem:[%s3 + $0x38] sm:$0xff]
    %v881 = vld [vmem:[%s4] sm:$0x1]
    %v883 = vperm.slane %v881, 0
    %vm885 = vcmask 523264
    %v887 = vsel %vm885, %v869, 0
    %v890 = vsel %vm885, %v872, 0
    %892 = vmatpush.msra.mxu0 0.0
    %893 = vmatpush.msra.mxu0 0.0
    %894 = vmatpush.msra.mxu0 0.0
    %895 = vmatpush.msra.mxu0 0.0
    %896 = vmatpush.msra.mxu0 0.0
    %897 = vmatpush.msra.mxu0 0.0
    %898 = vmatpush.msra.mxu0 0.0
    %899 = vmatpush.msra.mxu0 0.0
    %900 = vmatpush.msra.mxu0 %v880
    %901 = vmatpush.msra.mxu0 %v879
    %902 = vmatpush.msra.mxu0 %v878
    %903 = vmatpush.msra.mxu0 %v877
    %904 = vmatpush.msra.mxu0 %v876
    %905 = vmatpush.msra.mxu0 %v875
    %906 = vmatpush.msra.mxu0 %v874
    %907 = vmatpush.msra.mxu0 %v873
    %908 = vmatmul.f32.gmra.mxu0 %v887
    %v909 = vpop.f32.mrf.mxu0
    %v910 = vadd.f32 %v883, %v909
    %911 = vmatmul.f32.gmra.mxu0 %v890
    %v912 = vpop.f32.mrf.mxu0
    %v913 = vadd.f32 %v883, %v912
    %914 = vdwg.mxu0
    %vm915 = vcmask 64512
    %916 = vst.msk [vmem:[%s5] sm:$0xff] %vm915, %v910
    %917 = vst.msk [vmem:[%s5 + $0x8] sm:$0xff] %vm915, %v913
    // Predicated region
    $region26: #{tpu_custom_call.1} parent=1 // pred_check
      _
    $region27: #{tpu_custom_call.1} parent=1 // pred_check_branch
      %919 = sbr.rel (0) target = $region29
    $region28: #{tpu_custom_call.1} parent=1 // pred_region
      _
    $region29: #{tpu_custom_call.1} parent=1 // pred_fallthru
      _
    // Predicated region
    $region30: #{tpu_custom_call.1} parent=1 // pred_check
      _
    $region31: #{tpu_custom_call.1} parent=1 // pred_check_branch
      %921 = sbr.rel (0) target = $region33
    $region32: #{tpu_custom_call.1} parent=1 // pred_region
      _
    $region33: #{tpu_custom_call.1} parent=1 // pred_fallthru
      _
    %922 = vsyncpa [#allocation3], 1

</llo_original>
